<compile_context>
chip_gen: v7x
topology: tpu7x:2x2x1
jax: 0.10.0
libtpu: 0.0.40
codegen_flags: <defaults>
</compile_context>

<pallas_src>
import jax
import jax.numpy as jnp
from jax import lax
from jax.experimental import pallas as pl
from jax.experimental.pallas import tpu as pltpu


def _round_up(x: int, m: int) -> int:
    return ((x + m - 1) // m) * m


def my_conv1d_pad_same(x, w, b, *, stride, groups=1):
    """Forward of MyConv1dPadSame: SAME-padded strided Conv1d.

    x: (B, C_in, T)   w: (C_out, C_in, K)   b: (C_out,)
    returns (B, C_out, L) with L = ceil(T / stride), dtype = x.dtype.
    """
    if groups != 1:
        # TODO(synk): grouped conv (block-diagonal weight) not implemented.
        raise NotImplementedError("groups > 1 not supported")

    B, C_in, T = x.shape
    C_out, _, K = w.shape
    stride = int(stride)

    # ---- exact MyConv1dPadSame padding semantics -----------------------------
    L = (T + stride - 1) // stride
    p = max(0, (L - 1) * stride + K - T)
    pad_left = p // 2

    # ---- tiling --------------------------------------------------------------
    HALO = 128                      # halo width, in decimated (output) indices
    q_max = (K - 1) // stride       # max forward reach of a tap, decimated
    if q_max > HALO:
        # TODO(synk): (K-1)//stride > 128 would need a wider halo block.
        raise NotImplementedError("kernel_size too large for the 128-lane halo")

    need = L + q_max                # decimated length any real output touches
    TL = min(1024, _round_up(need, 128))
    if B == 1 and TL > 128 and _round_up(need, TL) // TL < 2:
        # Ensure >= 2 parallel grid steps so both v7x TensorCores get work.
        TL = max(128, _round_up((need + 1) // 2, 128))
    L_pad = _round_up(need, TL)
    n_lt = L_pad // TL

    # ---- wrapper prep: one pad + one input-sized phase transpose -------------
    cdt = jnp.bfloat16
    T_tot = L_pad * stride          # >= pad_left + T + pad_right (extra zeros)
    x_p = jnp.pad(x.astype(cdt),
                  ((0, 0), (0, 0), (pad_left, T_tot - T - pad_left)))
    # x_ph[b, r, c, m] == padded_x[b, c, m*stride + r]
    x_ph = x_p.reshape(B, C_in, L_pad, stride).transpose(0, 3, 1, 2)

    # Tap-major weight layout matching the in-kernel patch rows (row = k*C_in+c).
    w2 = jnp.transpose(w, (0, 2, 1)).reshape(C_out, K * C_in).astype(cdt)
    b2 = b.reshape(C_out, 1).astype(jnp.float32)

    out_dtype = x.dtype
    blocks_per_tile = TL // HALO
    last_halo_block = L_pad // HALO - 1

    def kernel(b_ref, w_ref, xm_ref, xh_ref, o_ref):
        xm = xm_ref[...]                                # (stride, C_in, TL)
        xh = xh_ref[...]                                # (stride, C_in, HALO)
        xc = jnp.concatenate([xm, xh], axis=-1)         # (stride, C_in, TL+HALO)
        # Assemble the (K*C_in, TL) im2col patch tile with static slices.
        taps = []
        for k in range(K):                              # static, unrolled
            q, r = k // stride, k % stride
            taps.append(xc[r, :, q:q + TL])             # (C_in, TL)
        patch = jnp.concatenate(taps, axis=0)           # (K*C_in, TL) bf16
        acc = jnp.dot(w_ref[...], patch,
                      preferred_element_type=jnp.float32)   # (C_out, TL) f32
        o_ref[...] = (acc + b_ref[...]).astype(o_ref.dtype)

    out = pl.pallas_call(
        kernel,
        out_shape=jax.ShapeDtypeStruct((B, C_out, L_pad), out_dtype),
        grid=(B, n_lt),
        in_specs=[
            # bias (C_out, 1) f32 — broadcast VPU add inside the kernel
            pl.BlockSpec((C_out, 1), lambda bi, j: (0, 0)),
            # weights (C_out, K*C_in) bf16 — resident across the whole grid
            pl.BlockSpec((C_out, K * C_in), lambda bi, j: (0, 0)),
            # main phase-decimated input tile
            pl.BlockSpec((None, stride, C_in, TL),
                         lambda bi, j: (bi, 0, 0, j)),
            # 128-lane halo from the next tile (clamped on the last tile —
            # those columns only feed discarded outputs >= L)
            pl.BlockSpec((None, stride, C_in, HALO),
                         lambda bi, j: (bi, 0, 0,
                                        jnp.minimum((j + 1) * blocks_per_tile,
                                                    last_halo_block))),
        ],
        out_specs=pl.BlockSpec((None, C_out, TL), lambda bi, j: (bi, 0, j)),
        compiler_params=pltpu.CompilerParams(
            dimension_semantics=("parallel", "parallel")),
    )(b2, w2, x_ph, x_ph)

    return out[:, :, :L]


def _ref_conv(x, w, b, stride):
    T = x.shape[-1]
    K = w.shape[-1]
    L = (T + stride - 1) // stride
    p = max(0, (L - 1) * stride + K - T)
    pad_l = p // 2
    pad_r = p - pad_l
    y = lax.conv_general_dilated(
        x, w, window_strides=(stride,), padding=[(pad_l, pad_r)],
        dimension_numbers=("NCH", "OIH", "NCH"),
        precision=lax.Precision.HIGHEST)
    return y + b[None, :, None]


if __name__ == "__main__":
    key = jax.random.PRNGKey(0)

    # (B, C_in, C_out, T, K, stride): asymmetric SAME padding, stride > 1,
    # stride == 1, B == 1 (tile split for megacore), multi-tile halo crossing.
    configs = [
        (2, 3, 32, 37, 16, 4),
        (2, 4, 16, 50, 7, 3),
        (1, 2, 8, 300, 5, 1),
        (2, 3, 16, 5000, 9, 2),
    ]

    for (B, C_in, C_out, T, K, stride) in configs:
        key, kx, kw, kb = jax.random.split(key, 4)
        x = jax.random.normal(kx, (B, C_in, T), jnp.float32)
        fan_in = C_in * K
        w = jax.random.normal(kw, (C_out, C_in, K), jnp.float32) * jnp.sqrt(2.0 / fan_in)
        bound = 1.0 / jnp.sqrt(fan_in)
        b = jax.random.uniform(kb, (C_out,), jnp.float32, minval=-bound, maxval=bound)

        out = jax.block_until_ready(my_conv1d_pad_same(x, w, b, stride=stride))

        L = (T + stride - 1) // stride
        ref = _ref_conv(x, w, b, stride)
        assert out.shape == ref.shape == (B, C_out, L), (out.shape, ref.shape)
        # bf16 MXU operands + f32 accumulation vs. the full-f32 reference.
        assert bool(jnp.allclose(out, ref, atol=5e-2, rtol=5e-2)), (
            f"mismatch vs XLA conv reference for config "
            f"{(B, C_in, C_out, T, K, stride)}")

    print("KERNEL_OK")
</pallas_src>

<mosaic_0001>
module attributes {stable_mosaic.version = 11 : i64} {
  func.func @kernel(%arg0: i32, %arg1: i32, %arg2: memref<32x1xf32, #tpu.memory_space<vmem>>, %arg3: memref<32x48xbf16, #tpu.memory_space<vmem>>, %arg4: memref<1x4x3x128xbf16, #tpu.memory_space<vmem>>, %arg5: memref<1x4x3x128xbf16, #tpu.memory_space<vmem>>, %arg6: memref<1x32x128xf32, #tpu.memory_space<vmem>>) attributes {dimension_semantics = [#tpu.dimension_semantics<parallel>, #tpu.dimension_semantics<parallel>], iteration_bounds = array<i64: 2, 1>, scalar_prefetch = 0 : i64, scratch_operands = 0 : i64, tpu.core_type = #tpu.core_type<tc>, window_params = [{pipeline_mode = #tpu.pipeline_mode<synchronous>, transform_indices = @transform_0, window_bounds = array<i64: 32, 1>}, {pipeline_mode = #tpu.pipeline_mode<synchronous>, transform_indices = @transform_1, window_bounds = array<i64: 32, 48>}, {transform_indices = @transform_2, window_bounds = array<i64: 1, 4, 3, 128>}, {transform_indices = @transform_3, window_bounds = array<i64: 1, 4, 3, 128>}, {transform_indices = @transform_4, window_bounds = array<i64: 1, 32, 128>}]} {
    %c0 = arith.constant 0 : index
    %c0_0 = arith.constant 0 : index
    %c0_1 = arith.constant 0 : index
    %c0_2 = arith.constant 0 : index
    %0 = vector.load %arg4[%c0, %c0_0, %c0_1, %c0_2] : memref<1x4x3x128xbf16, #tpu.memory_space<vmem>>, vector<1x4x3x128xbf16>
    %1 = vector.shape_cast %0 : vector<1x4x3x128xbf16> to vector<4x3x128xbf16>
    %c0_3 = arith.constant 0 : index
    %c0_4 = arith.constant 0 : index
    %c0_5 = arith.constant 0 : index
    %c0_6 = arith.constant 0 : index
    %2 = vector.load %arg5[%c0_3, %c0_4, %c0_5, %c0_6] : memref<1x4x3x128xbf16, #tpu.memory_space<vmem>>, vector<1x4x3x128xbf16>
    %3 = vector.shape_cast %2 : vector<1x4x3x128xbf16> to vector<4x3x128xbf16>
    %4 = tpu.concatenate %1, %3 in 2 : vector<4x3x128xbf16>, vector<4x3x128xbf16> -> vector<4x3x256xbf16>
    %5 = vector.extract_strided_slice %4 {offsets = [0, 0, 0], sizes = [1, 3, 128], strides = [1, 1, 1]} : vector<4x3x256xbf16> to vector<1x3x128xbf16>
    %6 = vector.shape_cast %5 : vector<1x3x128xbf16> to vector<3x128xbf16>
    %7 = vector.extract_strided_slice %4 {offsets = [1, 0, 0], sizes = [1, 3, 128], strides = [1, 1, 1]} : vector<4x3x256xbf16> to vector<1x3x128xbf16>
    %8 = vector.shape_cast %7 : vector<1x3x128xbf16> to vector<3x128xbf16>
    %9 = vector.extract_strided_slice %4 {offsets = [2, 0, 0], sizes = [1, 3, 128], strides = [1, 1, 1]} : vector<4x3x256xbf16> to vector<1x3x128xbf16>
    %10 = vector.shape_cast %9 : vector<1x3x128xbf16> to vector<3x128xbf16>
    %11 = vector.extract_strided_slice %4 {offsets = [3, 0, 0], sizes = [1, 3, 128], strides = [1, 1, 1]} : vector<4x3x256xbf16> to vector<1x3x128xbf16>
    %12 = vector.shape_cast %11 : vector<1x3x128xbf16> to vector<3x128xbf16>
    %13 = vector.extract_strided_slice %4 {offsets = [0, 0, 1], sizes = [1, 3, 128], strides = [1, 1, 1]} : vector<4x3x256xbf16> to vector<1x3x128xbf16>
    %14 = vector.shape_cast %13 : vector<1x3x128xbf16> to vector<3x128xbf16>
    %15 = vector.extract_strided_slice %4 {offsets = [1, 0, 1], sizes = [1, 3, 128], strides = [1, 1, 1]} : vector<4x3x256xbf16> to vector<1x3x128xbf16>
    %16 = vector.shape_cast %15 : vector<1x3x128xbf16> to vector<3x128xbf16>
    %17 = vector.extract_strided_slice %4 {offsets = [2, 0, 1], sizes = [1, 3, 128], strides = [1, 1, 1]} : vector<4x3x256xbf16> to vector<1x3x128xbf16>
    %18 = vector.shape_cast %17 : vector<1x3x128xbf16> to vector<3x128xbf16>
    %19 = vector.extract_strided_slice %4 {offsets = [3, 0, 1], sizes = [1, 3, 128], strides = [1, 1, 1]} : vector<4x3x256xbf16> to vector<1x3x128xbf16>
    %20 = vector.shape_cast %19 : vector<1x3x128xbf16> to vector<3x128xbf16>
    %21 = vector.extract_strided_slice %4 {offsets = [0, 0, 2], sizes = [1, 3, 128], strides = [1, 1, 1]} : vector<4x3x256xbf16> to vector<1x3x128xbf16>
    %22 = vector.shape_cast %21 : vector<1x3x128xbf16> to vector<3x128xbf16>
    %23 = vector.extract_strided_slice %4 {offsets = [1, 0, 2], sizes = [1, 3, 128], strides = [1, 1, 1]} : vector<4x3x256xbf16> to vector<1x3x128xbf16>
    %24 = vector.shape_cast %23 : vector<1x3x128xbf16> to vector<3x128xbf16>
    %25 = vector.extract_strided_slice %4 {offsets = [2, 0, 2], sizes = [1, 3, 128], strides = [1, 1, 1]} : vector<4x3x256xbf16> to vector<1x3x128xbf16>
    %26 = vector.shape_cast %25 : vector<1x3x128xbf16> to vector<3x128xbf16>
    %27 = vector.extract_strided_slice %4 {offsets = [3, 0, 2], sizes = [1, 3, 128], strides = [1, 1, 1]} : vector<4x3x256xbf16> to vector<1x3x128xbf16>
    %28 = vector.shape_cast %27 : vector<1x3x128xbf16> to vector<3x128xbf16>
    %29 = vector.extract_strided_slice %4 {offsets = [0, 0, 3], sizes = [1, 3, 128], strides = [1, 1, 1]} : vector<4x3x256xbf16> to vector<1x3x128xbf16>
    %30 = vector.shape_cast %29 : vector<1x3x128xbf16> to vector<3x128xbf16>
    %31 = vector.extract_strided_slice %4 {offsets = [1, 0, 3], sizes = [1, 3, 128], strides = [1, 1, 1]} : vector<4x3x256xbf16> to vector<1x3x128xbf16>
    %32 = vector.shape_cast %31 : vector<1x3x128xbf16> to vector<3x128xbf16>
    %33 = vector.extract_strided_slice %4 {offsets = [2, 0, 3], sizes = [1, 3, 128], strides = [1, 1, 1]} : vector<4x3x256xbf16> to vector<1x3x128xbf16>
    %34 = vector.shape_cast %33 : vector<1x3x128xbf16> to vector<3x128xbf16>
    %35 = vector.extract_strided_slice %4 {offsets = [3, 0, 3], sizes = [1, 3, 128], strides = [1, 1, 1]} : vector<4x3x256xbf16> to vector<1x3x128xbf16>
    %36 = vector.shape_cast %35 : vector<1x3x128xbf16> to vector<3x128xbf16>
    %37 = tpu.concatenate %6, %8, %10, %12, %14, %16, %18, %20, %22, %24, %26, %28, %30, %32, %34, %36 in 0 : vector<3x128xbf16>, vector<3x128xbf16>, vector<3x128xbf16>, vector<3x128xbf16>, vector<3x128xbf16>, vector<3x128xbf16>, vector<3x128xbf16>, vector<3x128xbf16>, vector<3x128xbf16>, vector<3x128xbf16>, vector<3x128xbf16>, vector<3x128xbf16>, vector<3x128xbf16>, vector<3x128xbf16>, vector<3x128xbf16>, vector<3x128xbf16> -> vector<48x128xbf16>
    %c0_7 = arith.constant 0 : index
    %c0_8 = arith.constant 0 : index
    %38 = vector.load %arg3[%c0_7, %c0_8] : memref<32x48xbf16, #tpu.memory_space<vmem>>, vector<32x48xbf16>
    %cst = arith.constant dense<0.000000e+00> : vector<32x128xf32>
    %39 = tpu.matmul %38, %37, %cst {dimension_numbers = #tpu.dot_dimension_numbers<[1], [0], [0], [1], [0, 0, 1, 1], [], []>} : vector<32x48xbf16>, vector<48x128xbf16>, vector<32x128xf32> -> vector<32x128xf32>
    %c0_9 = arith.constant 0 : index
    %c0_10 = arith.constant 0 : index
    %40 = vector.load %arg2[%c0_9, %c0_10] : memref<32x1xf32, #tpu.memory_space<vmem>>, vector<32x1xf32>
    %41 = vector.broadcast %40 : vector<32x1xf32> to vector<32x128xf32>
    %42 = arith.addf %39, %41 : vector<32x128xf32>
    %c0_11 = arith.constant 0 : index
    %c0_12 = arith.constant 0 : index
    %c0_13 = arith.constant 0 : index
    %43 = vector.load %arg6[%c0_11, %c0_12, %c0_13] : memref<1x32x128xf32, #tpu.memory_space<vmem>>, vector<1x32x128xf32>
    %44 = vector.shape_cast %43 : vector<1x32x128xf32> to vector<32x128xf32>
    %45 = vector.shape_cast %42 : vector<32x128xf32> to vector<1x32x128xf32>
    tpu.vector_store %arg6[%c0_11, %c0_12, %c0_13], %45 {strides = array<i32>} : memref<1x32x128xf32, #tpu.memory_space<vmem>>, vector<1x32x128xf32>,
    return
  }
  func.func @transform_0(%arg0: i32, %arg1: i32) -> (i32, i32) {
    %c0_i32 = arith.constant 0 : i32
    %c0_i32_0 = arith.constant 0 : i32
    %c0_i32_1 = arith.constant 0 : i32
    return %c0_i32, %c0_i32_0 : i32, i32
  }
  func.func @transform_1(%arg0: i32, %arg1: i32) -> (i32, i32) {
    %c0_i32 = arith.constant 0 : i32
    %c0_i32_0 = arith.constant 0 : i32
    %c0_i32_1 = arith.constant 0 : i32
    return %c0_i32, %c0_i32_0 : i32, i32
  }
  func.func @transform_2(%arg0: i32, %arg1: i32) -> (i32, i32, i32, i32) {
    %c0_i32 = arith.constant 0 : i32
    %c0_i32_0 = arith.constant 0 : i32
    %c0_i32_1 = arith.constant 0 : i32
    return %arg0, %c0_i32, %c0_i32_0, %arg1 : i32, i32, i32, i32
  }
  func.func @transform_3(%arg0: i32, %arg1: i32) -> (i32, i32, i32, i32) {
    %c1_i32 = arith.constant 1 : i32
    %0 = arith.addi %arg1, %c1_i32 : i32
    %c1_i32_0 = arith.constant 1 : i32
    %1 = arith.muli %0, %c1_i32_0 : i32
    %c0_i32 = arith.constant 0 : i32
    %2 = arith.minsi %1, %c0_i32 : i32
    %c0_i32_1 = arith.constant 0 : i32
    %c0_i32_2 = arith.constant 0 : i32
    %c0_i32_3 = arith.constant 0 : i32
    return %arg0, %c0_i32_1, %c0_i32_2, %2 : i32, i32, i32, i32
  }
  func.func @transform_4(%arg0: i32, %arg1: i32) -> (i32, i32, i32) {
    %c0_i32 = arith.constant 0 : i32
    %c0_i32_0 = arith.constant 0 : i32
    return %arg0, %c0_i32, %arg1 : i32, i32, i32
  }
}

</mosaic_0001>

<llo_original>
// kernel: tpu_custom_call.1
$region0: #{tpu_custom_call.1}
  #allocation0 [shape = 'u32[]', space=smem, size = 0x4, offset = 0x4, fixed_abs, tag = 'smem constant byte address 0x4 - core index']
  #allocation1 [shape = 'u32[144,128]{1,0:T(1,128)}', space=vmem, size = 0x12000, scoped, tag = 'internal scratch']
  %s0 = inlined_call_operand.vmem [shape: f32[32,1], index: 0, kind: input, shape index: {}]
  %s1 = inlined_call_operand.vmem [shape: bf16[32,48], index: 1, kind: input, shape index: {}]
  %s2 = inlined_call_operand.vmem [shape: bf16[2,4,3,128], index: 2, kind: input, shape index: {}]
  %s3 = inlined_call_operand.vmem [shape: bf16[2,4,3,128], index: 3, kind: input, shape index: {}]
  %s4 = inlined_call_operand.hbm [shape: f32[2,32,128], index: 4, kind: output, shape index: {}]
  %s5 = sld [smem:[#allocation0]]
  $region49: #{tpu_custom_call.1} parent=0
    _
  %s7 = ssub.s32 1, %s5
  %s8 = scalar_select 0, %s7, %s5
  $region1: #{tpu_custom_call.1} parent=0
    #allocation2 [shape = 'u8[32768]{0}', space=vmem, size = 0x8000, scoped, tag = 'output window, operand 0']
    #allocation3 [shape = 's32[2]{0}', space=sflag, size = 0x8, scoped, tag = 'scoped memory for tpu_custom_call.1']
    %9 = vsyncpa [#allocation3], 0
    %s10 = scalar_lea.sflag [#allocation3], 1
    %11 = vsyncpa %s10, 0
    loop: start=0, step=1, limit=4
    $region2: #{tpu_custom_call.1} parent=1 // loop_pre_header
      _
    $region3: #{tpu_custom_call.1} parent=1 // loop_header
      %s13 = sphi 0, %s17
      %p14 = scmp.ge.s32.totalorder %s13, 4
      %s20 = sphi 0, %s32
      %s21 = sphi 0, %s28
      %s22 = sphi 0, %s20
      %s23 = sphi 0, %s21
      %s24 = sphi 0, %s22
      %s25 = sphi 0, %s23
      %s33 = sphi 0, %s33
      %s35 = sphi 0, %s33
      %s36 = sphi 0, %s35
      %s50 = sphi 0, %s36
      %s54 = sphi 0, %s54
      %s56 = sphi 0, %s54
      %s57 = sphi 0, %s56
      %s71 = sphi 0, %s57
      %s79 = sphi 0, %s81
      %s82 = sphi 0, %s79
      %s83 = sphi 0, %s82
      %s99 = sphi 0, %s83
      %s113 = sphi 0, %s115
      %s116 = sphi 0, %s113
      %s117 = sphi 0, %s116
      %s133 = sphi 0, %s117
      %s141 = sphi 0, %s143
      %s144 = sphi 0, %s141
      %s145 = sphi 0, %s144
      %s161 = sphi 0, %s145
    $region4: #{tpu_custom_call.1} parent=1 // loop_header_branch
      %16 = sbr.rel (%p14) target = $region8
    $region5: #{tpu_custom_call.1} parent=1 // loop_body
      %s18 = ssub.s32 %s13, 1
      %s19 = ssub.s32 %s13, 2
      %s26 = sadd.s32 1, %s21
      %p27 = scmp.ge.s32.totalorder %s26, 1
      %s28 = scalar_select %p27, 0, %s26
      %s29 = sadd.s32 1, %s20
      %s30 = scalar_select %p27, %s29, %s20
      %p31 = scmp.ge.s32.totalorder %s30, 2
      %s32 = scalar_select %p31, 0, %s30
      %s34 = sadd.s32 %s33, 1
      %p37 = scmp.eq.s32.totalorder %s13, 1
      %p38 = scmp.ne.s32.totalorder %s33, %s35
      %p39 = scmp.eq.s32.totalorder %s13, 0
      %p40 = por %p38, %p39
      %p41 = scmp.ne.s32.totalorder %s33, %s35
      %p42 = scmp.eq.s32.totalorder %s18, 1
      %p43 = por %p41, %p42
      %p44 = scmp.ne.s32.totalorder %s35, %s36
      %p45 = scmp.eq.s32.totalorder %s18, 0
      %p46 = por %p44, %p45
      %p47 = scmp.ne.s32.totalorder %s35, %s36
      %p48 = scmp.eq.s32.totalorder %s19, 1
      %p49 = por %p47, %p48
      %p51 = scmp.ne.s32.totalorder %s36, %s50
      %p52 = scmp.eq.s32.totalorder %s19, 0
      %p53 = por %p51, %p52
      %s55 = sadd.s32 %s54, 1
      %p58 = scmp.eq.s32.totalorder %s13, 1
      %p59 = scmp.ne.s32.totalorder %s54, %s56
      %p60 = scmp.eq.s32.totalorder %s13, 0
      %p61 = por %p59, %p60
      %p62 = scmp.ne.s32.totalorder %s54, %s56
      %p63 = scmp.eq.s32.totalorder %s18, 1
      %p64 = por %p62, %p63
      %p65 = scmp.ne.s32.totalorder %s56, %s57
      %p66 = scmp.eq.s32.totalorder %s18, 0
      %p67 = por %p65, %p66
      %p68 = scmp.ne.s32.totalorder %s56, %s57
      %p69 = scmp.eq.s32.totalorder %s19, 1
      %p70 = por %p68, %p69
      %p72 = scmp.ne.s32.totalorder %s57, %s71
      %p73 = scmp.eq.s32.totalorder %s19, 0
      %p74 = por %p72, %p73
      %s75 = ssub.s32 %s20, %s32
      %s76 = ssub.s32 %s21, %s28
      %s77 = sor.u32 %s75, %s76
      %p78 = scmp.eq.s32.totalorder %s77, 0
      %s80 = sadd.s32 %s79, 1
      %s81 = scalar_select %p78, %s79, %s80
      %p84 = pneg %p78
      %p85 = scmp.eq.s32.totalorder %s13, 1
      %p86 = por %p84, %p85
      %p87 = scmp.ne.s32.totalorder %s79, %s82
      %p88 = scmp.eq.s32.totalorder %s13, 0
      %p89 = por %p87, %p88
      %p90 = scmp.ne.s32.totalorder %s79, %s82
      %p91 = scmp.eq.s32.totalorder %s18, 1
      %p92 = por %p90, %p91
      %p93 = scmp.ne.s32.totalorder %s82, %s83
      %p94 = scmp.eq.s32.totalorder %s18, 0
      %p95 = por %p93, %p94
      %p96 = scmp.ne.s32.totalorder %s82, %s83
      %p97 = scmp.eq.s32.totalorder %s19, 1
      %p98 = por %p96, %p97
      %p100 = scmp.ne.s32.totalorder %s83, %s99
      %p101 = scmp.eq.s32.totalorder %s19, 0
      %p102 = por %p100, %p101
      %s103 = sadd.s32 %s21, 1
      %p104 = scmp.lt.s32.totalorder %s103, 0
      %s105 = scalar_select %p104, %s103, 0
      %s106 = sadd.s32 %s28, 1
      %p107 = scmp.lt.s32.totalorder %s106, 0
      %s108 = scalar_select %p107, %s106, 0
      %s109 = ssub.s32 %s20, %s32
      %s110 = ssub.s32 %s105, %s108
      %s111 = sor.u32 %s109, %s110
      %p112 = scmp.eq.s32.totalorder %s111, 0
      %s114 = sadd.s32 %s113, 1
      %s115 = scalar_select %p112, %s113, %s114
      %p118 = pneg %p112
      %p119 = scmp.eq.s32.totalorder %s13, 1
      %p120 = por %p118, %p119
      %p121 = scmp.ne.s32.totalorder %s113, %s116
      %p122 = scmp.eq.s32.totalorder %s13, 0
      %p123 = por %p121, %p122
      %p124 = scmp.ne.s32.totalorder %s113, %s116
      %p125 = scmp.eq.s32.totalorder %s18, 1
      %p126 = por %p124, %p125
      %p127 = scmp.ne.s32.totalorder %s116, %s117
      %p128 = scmp.eq.s32.totalorder %s18, 0
      %p129 = por %p127, %p128
      %p130 = scmp.ne.s32.totalorder %s116, %s117
      %p131 = scmp.eq.s32.totalorder %s19, 1
      %p132 = por %p130, %p131
      %p134 = scmp.ne.s32.totalorder %s117, %s133
      %p135 = scmp.eq.s32.totalorder %s19, 0
      %p136 = por %p134, %p135
      %s137 = ssub.s32 %s20, %s32
      %s138 = ssub.s32 %s21, %s28
      %s139 = sor.u32 %s137, %s138
      %p140 = scmp.eq.s32.totalorder %s139, 0
      %s142 = sadd.s32 %s141, 1
      %s143 = scalar_select %p140, %s141, %s142
      %p146 = pneg %p140
      %p147 = scmp.eq.s32.totalorder %s13, 1
      %p148 = por %p146, %p147
      %p149 = scmp.ne.s32.totalorder %s141, %s144
      %p150 = scmp.eq.s32.totalorder %s13, 0
      %p151 = por %p149, %p150
      %p152 = scmp.ne.s32.totalorder %s141, %s144
      %p153 = scmp.eq.s32.totalorder %s18, 1
      %p154 = por %p152, %p153
      %p155 = scmp.ne.s32.totalorder %s144, %s145
      %p156 = scmp.eq.s32.totalorder %s18, 0
      %p157 = por %p155, %p156
      %p158 = scmp.ne.s32.totalorder %s144, %s145
      %p159 = scmp.eq.s32.totalorder %s19, 1
      %p160 = por %p158, %p159
      %p162 = scmp.ne.s32.totalorder %s145, %s161
      %p163 = scmp.eq.s32.totalorder %s19, 0
      %p164 = por %p162, %p163
      %p165 = scmp.le.s32.totalorder 1, %s13
      %p166 = scmp.lt.s32.totalorder %s13, 3
      %p167 = pnand %p165, %p166
      %p168 = pneg %p167
      // Predicated region
      $region9: #{tpu_custom_call.1} parent=5 // pred_check
        _
      $region10: #{tpu_custom_call.1} parent=5 // pred_check_branch
        %170 = sbr.rel (%p167) target = $region12
      $region11: #{tpu_custom_call.1} parent=5 // pred_region
        %s171 = ssub.s32 %s13, 1
        // Predicated region
        $region13: #{tpu_custom_call.1} parent=11 // pred_check
          %p172 = pneg %p46
        $region14: #{tpu_custom_call.1} parent=11 // pred_check_branch
          %174 = sbr.rel (%p172) target = $region16
        $region15: #{tpu_custom_call.1} parent=11 // pred_region
          _
        $region16: #{tpu_custom_call.1} parent=11 // pred_fallthru
          _
        // Predicated region
        $region17: #{tpu_custom_call.1} parent=11 // pred_check
          %p175 = pneg %p67
        $region18: #{tpu_custom_call.1} parent=11 // pred_check_branch
          %177 = sbr.rel (%p175) target = $region20
        $region19: #{tpu_custom_call.1} parent=11 // pred_region
          _
        $region20: #{tpu_custom_call.1} parent=11 // pred_fallthru
          _
      $region12: #{tpu_custom_call.1} parent=5 // pred_fallthru
        _
      %p178 = scmp.lt.s32.totalorder %s13, 2
      // Predicated region
      $region21: #{tpu_custom_call.1} parent=5 // pred_check
        %p179 = pneg %p178
      $region22: #{tpu_custom_call.1} parent=5 // pred_check_branch
        %181 = sbr.rel (%p179) target = $region24
      $region23: #{tpu_custom_call.1} parent=5 // pred_region
        // Predicated region
        $region25: #{tpu_custom_call.1} parent=23 // pred_check
          %p182 = pneg %p89
        $region26: #{tpu_custom_call.1} parent=23 // pred_check_branch
          %184 = sbr.rel (%p182) target = $region28
        $region27: #{tpu_custom_call.1} parent=23 // pred_region
          %p185 = scmp.lt.s32.totalorder %s20, 1
          %s186 = scalar_select %p185, %s20, 1
          %p187 = scmp.lt.s32.totalorder %s21, 0
          %s188 = scalar_select %p187, %s21, 0
          %s189 = smul.addr %s186, 4
          %s190 = sadd.s32 %s188, %s189
          %s191 = smul.addr %s190, 2
          %s192 = scalar_lea.vmem %s2, %s191
        $region28: #{tpu_custom_call.1} parent=23 // pred_fallthru
          _
        // Predicated region
        $region29: #{tpu_custom_call.1} parent=23 // pred_check
          %p193 = pneg %p123
        $region30: #{tpu_custom_call.1} parent=23 // pred_check_branch
          %195 = sbr.rel (%p193) target = $region32
        $region31: #{tpu_custom_call.1} parent=23 // pred_region
          %s196 = sadd.s32 %s21, 1
          %p197 = scmp.lt.s32.totalorder %s196, 0
          %s198 = scalar_select %p197, %s196, 0
          %p199 = scmp.lt.s32.totalorder %s20, 1
          %s200 = scalar_select %p199, %s20, 1
          %p201 = scmp.lt.s32.totalorder %s198, 0
          %s202 = scalar_select %p201, %s198, 0
          %s203 = smul.addr %s200, 4
          %s204 = sadd.s32 %s202, %s203
          %s205 = smul.addr %s204, 2
          %s206 = scalar_lea.vmem %s3, %s205
          %s207 = sadd.s32 %s21, 1
          %p208 = scmp.lt.s32.totalorder %s207, 0
          %s209 = scalar_select %p208, %s207, 0
        $region32: #{tpu_custom_call.1} parent=23 // pred_fallthru
          _
      $region24: #{tpu_custom_call.1} parent=5 // pred_fallthru
        _
      %p210 = scmp.le.s32.totalorder 1, %s13
      %p211 = scmp.lt.s32.totalorder %s13, 3
      %p212 = pnand %p210, %p211
      %p213 = pneg %p212
      // Predicated region
      $region33: #{tpu_custom_call.1} parent=5 // pred_check
        _
      $region34: #{tpu_custom_call.1} parent=5 // pred_check_branch
        %215 = sbr.rel (%p212) target = $region36
      $region35: #{tpu_custom_call.1} parent=5 // pred_region
        %s216 = ssub.s32 %s13, 1
        %p217 = pneg %p46
        %p218 = pneg %p43
        %p219 = pneg %p67
        %p220 = pneg %p64
        %p221 = scmp.lt.s32.totalorder %s22, 1
        %s222 = scalar_select %p221, %s22, 1
        %p223 = scmp.lt.s32.totalorder %s23, 0
        %s224 = scalar_select %p223, %s23, 0
        %s225 = smul.addr %s222, 4
        %s226 = sadd.s32 %s224, %s225
        %s227 = smul.addr %s226, 2
        %s228 = scalar_lea.vmem %s2, %s227
        %p229 = pneg %p95
        %p230 = pneg %p92
        %s231 = sadd.s32 %s23, 1
        %p232 = scmp.lt.s32.totalorder %s231, 0
        %s233 = scalar_select %p232, %s231, 0
        %p234 = scmp.lt.s32.totalorder %s22, 1
        %s235 = scalar_select %p234, %s22, 1
        %p236 = scmp.lt.s32.totalorder %s233, 0
        %s237 = scalar_select %p236, %s233, 0
        %s238 = smul.addr %s235, 4
        %s239 = sadd.s32 %s237, %s238
        %s240 = smul.addr %s239, 2
        %s241 = scalar_lea.vmem %s3, %s240
        %p242 = pneg %p129
        %p243 = pneg %p126
        %p244 = pneg %p157
        %p245 = pneg %p154
        %s246 = sand.u32 %s144, 1
        %s247 = scalar_lea.sflag [#allocation3], %s246
        %s248 = sand.u32 %s144, 1
        %s249 = smul.addr %s248, 32
        %s250 = scalar_lea.vmem [#allocation2], %s249
        %p251 = scmp.lt.s32.totalorder %s22, 1
        %s252 = scalar_select %p251, %s22, 1
        %p253 = scmp.lt.s32.totalorder %s23, 0
        %s254 = scalar_select %p253, %s23, 0
        %s255 = smul.addr %s252, 4
        %s256 = sadd.s32 %s254, %s255
        %s257 = smul.addr %s256, 2
        %s258 = scalar_lea.vmem %s2, %s257
        %s259 = sadd.s32 %s23, 1
        %p260 = scmp.lt.s32.totalorder %s259, 0
        %s261 = scalar_select %p260, %s259, 0
        %p262 = scmp.lt.s32.totalorder %s22, 1
        %s263 = scalar_select %p262, %s22, 1
        %p264 = scmp.lt.s32.totalorder %s261, 0
        %s265 = scalar_select %p264, %s261, 0
        %s266 = smul.addr %s263, 4
        %s267 = sadd.s32 %s265, %s266
        %s268 = smul.addr %s267, 2
        %s269 = scalar_lea.vmem %s3, %s268
        %s270 = sadd.s32 %s23, 1
        %p271 = scmp.lt.s32.totalorder %s270, 0
        %s272 = scalar_select %p271, %s270, 0
        %v274 = vld [vmem:[%s258] sm:$0x3]
        %v275 = vld [vmem:[%s258 + $0x2] sm:$0x3]
        %v276 = vld [vmem:[%s258 + $0x4] sm:$0x3]
        %v277 = vld [vmem:[%s258 + $0x6] sm:$0x3]
        %v278 = vld [vmem:[%s269] sm:$0x3]
        %v279 = vld [vmem:[%s269 + $0x2] sm:$0x3]
        %v280 = vld [vmem:[%s269 + $0x4] sm:$0x3]
        %v281 = vld [vmem:[%s269 + $0x6] sm:$0x3]
        %v283 = vshrl.u32 %v275, 16
        %v285 = vrot.slane %v283, 6
        %v286 = vshll.u32 %v275, 16
        %v288 = vrot.slane %v286, 7
        %v289 = vor.u32 %v285, %v288
        %v292 = vrot.slane %v276, 5
        %v294 = vshrl.u32 %v277, 16
        %v296 = vrot.slane %v294, 3
        %v297 = vshll.u32 %v277, 16
        %v299 = vrot.slane %v297, 4
        %v300 = vor.u32 %v296, %v299
        %v304 = vrot.slane %v274, 2
        %v305 = vrot.slane %v278, 2
        %306 = vrot.lane.b32.xlu0 %v304, 127
        %v307 = vpop.permute.xlu0 %306
        %308 = vrot.lane.b32.xlu0 %v305, 127
        %v309 = vpop.permute.xlu0 %308
        %vm310 = vcmask 1039360
        %v311 = vsel %vm310, %v307, %v309
        %v312 = vrot.slane %v286, 1
        %v314 = vshll.u32 %v279, 16
        %v316 = vrot.slane %v314, 1
        %v317 = vor.u32 %v283, %v312
        %v318 = vshrl.u32 %v279, 16
        %v320 = vor.u32 %v318, %v316
        %321 = vrot.lane.b32.xlu0 %v312, 127
        %v322 = vpop.permute.xlu0 %321
        %323 = vrot.lane.b32.xlu0 %v316, 127
        %v324 = vpop.permute.xlu0 %323
        %325 = vrot.lane.b32.xlu0 %v317, 127
        %v326 = vpop.permute.xlu0 %325
        %327 = vrot.lane.b32.xlu0 %v320, 127
        %v328 = vpop.permute.xlu0 %327
        %v329 = vsel %vm310, %v322, %v324
        %v330 = vsel %vm310, %v326, %v328
        %v333 = vrot.slane %v276, 7
        %v334 = vrot.slane %v280, 7
        %335 = vrot.lane.b32.xlu0 %v333, 127
        %v336 = vpop.permute.xlu0 %335
        %337 = vrot.lane.b32.xlu0 %v334, 127
        %v338 = vpop.permute.xlu0 %337
        %v339 = vsel %vm310, %v336, %v338
        %v340 = vrot.slane %v294, 5
        %v341 = vrot.slane %v297, 6
        %v342 = vor.u32 %v340, %v341
        %v344 = vshrl.u32 %v281, 16
        %v346 = vrot.slane %v344, 5
        %v347 = vshll.u32 %v281, 16
        %v349 = vrot.slane %v347, 6
        %v350 = vor.u32 %v346, %v349
        %351 = vrot.lane.b32.xlu0 %v342, 127
        %v352 = vpop.permute.xlu0 %351
        %353 = vrot.lane.b32.xlu0 %v350, 127
        %v354 = vpop.permute.xlu0 %353
        %v355 = vsel %vm310, %v352, %v354
        %v357 = vrot.slane %v274, 4
        %v358 = vrot.slane %v278, 4
        %359 = vrot.lane.b32.xlu0 %v357, 126
        %v360 = vpop.permute.xlu0 %359
        %361 = vrot.lane.b32.xlu0 %v358, 126
        %v362 = vpop.permute.xlu0 %361
        %vm363 = vcmask 1031168
        %v364 = vsel %vm363, %v360, %v362
        %v365 = vrot.slane %v283, 2
        %v366 = vrot.slane %v286, 3
        %v367 = vor.u32 %v365, %v366
        %v368 = vrot.slane %v318, 2
        %v369 = vrot.slane %v314, 3
        %v370 = vor.u32 %v368, %v369
        %371 = vrot.lane.b32.xlu0 %v367, 126
        %v372 = vpop.permute.xlu0 %371
        %373 = vrot.lane.b32.xlu0 %v370, 126
        %v374 = vpop.permute.xlu0 %373
        %v375 = vsel %vm363, %v372, %v374
        %v377 = vrot.slane %v276, 1
        %v378 = vrot.slane %v280, 1
        %379 = vrot.lane.b32.xlu0 %v377, 126
        %v380 = vpop.permute.xlu0 %379
        %381 = vrot.lane.b32.xlu0 %v378, 126
        %v382 = vpop.permute.xlu0 %381
        %v383 = vsel %vm363, %v380, %v382
        %v385 = vrot.slane %v294, 7
        %v386 = vor.u32 %v385, %v297
        %v387 = vrot.slane %v344, 7
        %v388 = vor.u32 %v387, %v347
        %389 = vrot.lane.b32.xlu0 %v386, 126
        %v390 = vpop.permute.xlu0 %389
        %391 = vrot.lane.b32.xlu0 %v388, 126
        %v392 = vpop.permute.xlu0 %391
        %v393 = vsel %vm363, %v390, %v392
        %v395 = vrot.slane %v274, 6
        %v396 = vrot.slane %v278, 6
        %397 = vrot.lane.b32.xlu0 %v395, 125
        %v398 = vpop.permute.xlu0 %397
        %399 = vrot.lane.b32.xlu0 %v396, 125
        %v400 = vpop.permute.xlu0 %399
        %vm401 = vcmask 1022976
        %v402 = vsel %vm401, %v398, %v400
        %v403 = vrot.slane %v283, 4
        %v404 = vrot.slane %v286, 5
        %v405 = vor.u32 %v403, %v404
        %v406 = vrot.slane %v318, 4
        %v407 = vrot.slane %v314, 5
        %v408 = vor.u32 %v406, %v407
        %409 = vrot.lane.b32.xlu0 %v405, 125
        %v410 = vpop.permute.xlu0 %409
        %411 = vrot.lane.b32.xlu0 %v408, 125
        %v412 = vpop.permute.xlu0 %411
        %v413 = vsel %vm401, %v410, %v412
        %v415 = vrot.slane %v276, 3
        %v416 = vrot.slane %v280, 3
        %417 = vrot.lane.b32.xlu0 %v415, 125
        %v418 = vpop.permute.xlu0 %417
        %419 = vrot.lane.b32.xlu0 %v416, 125
        %v420 = vpop.permute.xlu0 %419
        %v421 = vsel %vm401, %v418, %v420
        %v422 = vrot.slane %v294, 1
        %v423 = vrot.slane %v297, 2
        %v424 = vor.u32 %v422, %v423
        %v425 = vrot.slane %v344, 1
        %v426 = vrot.slane %v347, 2
        %v427 = vor.u32 %v425, %v426
        %428 = vrot.lane.b32.xlu0 %v424, 125
        %v429 = vpop.permute.xlu0 %428
        %430 = vrot.lane.b32.xlu0 %v427, 125
        %v431 = vpop.permute.xlu0 %430
        %v432 = vsel %vm401, %v429, %v431
        %vm434 = vcmask 1041408
        %vm435 = vsmask.f32 1280
        %vm436 = vmand %vm434, %vm435
        %v437 = vsel %vm436, %v274, %v289
        %vm438 = vcmask 1042432
        %v441 = vsel %vm438, %v437, %v292
        %vm443 = vcmask 1044480
        %vm444 = vsmask.f32 4352
        %vm445 = vmand %vm443, %vm444
        %v446 = vsel %vm445, %v441, %v300
        %vm447 = vcmask 1045504
        %v450 = vsel %vm447, %v446, %v311
        %vm452 = vcmask 1047552
        %vm453 = vsmask.f32 7424
        %vm454 = vmand %vm452, %vm453
        %v455 = vsel %vm454, %v450, %v329
        %vm456 = vcmask 1040384
        %v459 = vsel %vm456, %v330, %v339
        %vm461 = vcmask 1042432
        %vm462 = vsmask.f32 2304
        %vm463 = vmand %vm461, %vm462
        %v464 = vsel %vm463, %v459, %v355
        %vm465 = vcmask 1043456
        %v468 = vsel %vm465, %v464, %v364
        %vm470 = vcmask 1045504
        %vm471 = vsmask.f32 5376
        %vm472 = vmand %vm470, %vm471
        %v473 = vsel %vm472, %v468, %v375
        %vm474 = vcmask 1046528
        %v477 = vsel %vm474, %v473, %v383
        %vm479 = vcmask 1040384
        %vm480 = vsmask.f32 256
        %vm481 = vmand %vm479, %vm480
        %v482 = vsel %vm481, %v383, %v393
        %vm483 = vcmask 1041408
        %v486 = vsel %vm483, %v482, %v402
        %vm488 = vcmask 1043456
        %vm489 = vsmask.f32 3328
        %vm490 = vmand %vm488, %vm489
        %v491 = vsel %vm490, %v486, %v413
        %vm492 = vcmask 1044480
        %v495 = vsel %vm492, %v491, %v421
        %vm497 = vcmask 1046528
        %vm498 = vsmask.f32 6400
        %vm499 = vmand %vm497, %vm498
        %v500 = vsel %vm499, %v495, %v432
        %v501 = vld [vmem:[%s1] sm:$0xf]
        %v502 = vld [vmem:[%s1 + $0x4] sm:$0xf]
        %v503 = vld [vmem:[%s1 + $0x8] sm:$0xf]
        %v504 = vld [vmem:[%s1 + $0xc] sm:$0xf]
        %v505 = vld [vmem:[%s0] sm:$0xff]
        %v506 = vld [vmem:[%s0 + $0x8] sm:$0xff]
        %v507 = vld [vmem:[%s0 + $0x10] sm:$0xff]
        %v508 = vld [vmem:[%s0 + $0x18] sm:$0xff]
        %510 = vset.pattern.permute.xlu0 0
        %511 = vperm.xlu0 %510, %v505
        %v512 = vpop.permute.xlu0 %511
        %515 = vset.pattern.permute.xlu0 0
        %516 = vperm.xlu0 %515, %v506
        %v517 = vpop.permute.xlu0 %516
        %520 = vset.pattern.permute.xlu0 0
        %521 = vperm.xlu0 %520, %v507
        %v522 = vpop.permute.xlu0 %521
        %525 = vset.pattern.permute.xlu0 0
        %526 = vperm.xlu0 %525, %v508
        %v527 = vpop.permute.xlu0 %526
        %v533 = vunpack.c.l.b16 %v501
        %v534 = vunpack.c.l.b16 %v502
        %v535 = vunpack.c.l.b16 %v503
        %v536 = vunpack.c.l.b16 %v504
        %v537 = vpack.c.b16 %v534, %v533
        %v538 = vpack.c.b16 %v536, %v535
        %vm539 = vcmask 392192
        %v541 = vsel %vm539, %v537, 0
        %v544 = vsel %vm539, %v538, 0
        %546 = vmatprep.subr.bf16.mxu0 0
        %547 = vmatpush1.bf16.msra.mxu0 %v455
        %548 = vmatprep.subr.bf16.mxu0 0
        %549 = vmatpush1.bf16.msra.mxu0 %v477
        %550 = vmatprep.subr.bf16.mxu0 0
        %551 = vmatpush1.bf16.msra.mxu0 %v500
        %552 = vmatprep.subr.bf16.mxu0 0
        %553 = vmatpush1.bf16.msra.mxu0 0
        %554 = vmatprep.subr.bf16.mxu0 0
        %555 = vmatpush1.bf16.msra.mxu0 0
        %556 = vmatprep.subr.bf16.mxu0 0
        %557 = vmatpush1.bf16.msra.mxu0 0
        %558 = vmatprep.subr.bf16.mxu0 0
        %559 = vmatpush1.bf16.msra.mxu0 0
        %560 = vmatprep.subr.bf16.mxu0 0
        %561 = vmatpush1.bf16.msra.mxu0 0
        %562 = vmatprep.subr.bf16.mxu0 0
        %563 = vmatpush1.bf16.msra.mxu0 0
        %564 = vmatprep.subr.bf16.mxu0 0
        %565 = vmatpush1.bf16.msra.mxu0 0
        %566 = vmatprep.subr.bf16.mxu0 0
        %567 = vmatpush1.bf16.msra.mxu0 0
        %568 = vmatprep.subr.bf16.mxu0 0
        %569 = vmatpush1.bf16.msra.mxu0 0
        %570 = vmatprep.subr.bf16.mxu0 0
        %571 = vmatpush1.bf16.msra.mxu0 0
        %572 = vmatprep.subr.bf16.mxu0 0
        %573 = vmatpush1.bf16.msra.mxu0 0
        %574 = vmatprep.subr.bf16.mxu0 0
        %575 = vmatpush1.bf16.msra.mxu0 0
        %576 = vmatprep.subr.bf16.mxu0 0
        %577 = vmatpush1.bf16.msra.mxu0 0
        %578 = vmatprep.mubr.bf16.mxu0 0
        %579 = vmatmul.mubr.bf16.gmra.mrb[0].mxu0 %v541
        %v580 = vpop.f32.mrb[0].mxu0
        %v581 = vadd.f32 %v512, %v580
        %v582 = vpop.f32.mrb[0].mxu0
        %v583 = vpop.f32.mrb[0].mxu0
        %v584 = vadd.f32 %v517, %v583
        %v585 = vpop.f32.mrb[0].mxu0
        %586 = vmatprep.mubr.bf16.mxu0 0
        %587 = vmatmul.mubr.bf16.gmra.mrb[0].mxu0 %v544
        %v588 = vpop.f32.mrb[0].mxu0
        %v589 = vadd.f32 %v522, %v588
        %v590 = vpop.f32.mrb[0].mxu0
        %v591 = vpop.f32.mrb[0].mxu0
        %v592 = vadd.f32 %v527, %v591
        %v593 = vpop.f32.mrb[0].mxu0
        %594 = vdwg.mxu0
        %595 = vst [vmem:[%s250] sm:$0xff] %v581
        %596 = vst [vmem:[%s250 + $0x8] sm:$0xff] %v584
        %597 = vst [vmem:[%s250 + $0x10] sm:$0xff] %v589
        %598 = vst [vmem:[%s250 + $0x18] sm:$0xff] %v592
        %s599 = sand.u32 %s144, 1
        %s600 = scalar_lea.sflag [#allocation3], %s599
        %s601 = sand.u32 %s144, 1
        %s602 = smul.addr %s601, 32
        %s603 = scalar_lea.vmem [#allocation2], %s602
        // Predicated region
        $region37: #{tpu_custom_call.1} parent=35 // pred_check
          %p604 = pneg %p154
        $region38: #{tpu_custom_call.1} parent=35 // pred_check_branch
          %606 = sbr.rel (%p604) target = $region40
        $region39: #{tpu_custom_call.1} parent=35 // pred_region
          %s608 = ssub.s32 512, 512
          %609 = vsyncadd %s600, %s608
          %s610 = smul.addr %s22, 4
          %s611 = sadd.s32 %s23, %s610
          %s612 = smul.addr %s611, 128
          %s613 = scalar_lea.hbm %s4, %s612
          %s614 = sshll.u32 %s603, 4
          %s615 = int_to_ptr.vmem [resolvable:$true] %s614
          %620 = dma.vmem_to_hbm [thread:$0]  %s615, 512, %s613, %s600, 128, 128, 8
        $region40: #{tpu_custom_call.1} parent=35 // pred_fallthru
          _
      $region36: #{tpu_custom_call.1} parent=5 // pred_fallthru
        _
      %p621 = scmp.le.s32.totalorder 2, %s13
      // Predicated region
      $region41: #{tpu_custom_call.1} parent=5 // pred_check
        %p622 = pneg %p621
      $region42: #{tpu_custom_call.1} parent=5 // pred_check_branch
        %624 = sbr.rel (%p622) target = $region44
      $region43: #{tpu_custom_call.1} parent=5 // pred_region
        %s625 = ssub.s32 %s13, 2
        // Predicated region
        $region45: #{tpu_custom_call.1} parent=43 // pred_check
          %p626 = pneg %p160
        $region46: #{tpu_custom_call.1} parent=43 // pred_check_branch
          %628 = sbr.rel (%p626) target = $region48
        $region47: #{tpu_custom_call.1} parent=43 // pred_region
          %s629 = sand.u32 %s145, 1
          %s630 = scalar_lea.sflag [#allocation3], %s629
          %s631 = sand.u32 %s145, 1
          %s632 = smul.addr %s631, 32
          %s633 = scalar_lea.vmem [#allocation2], %s632
          %634 = dma.done %s630, 512
        $region48: #{tpu_custom_call.1} parent=43 // pred_fallthru
          _
      $region44: #{tpu_custom_call.1} parent=5 // pred_fallthru
        _
    $region6: #{tpu_custom_call.1} parent=1 // loop_footer
      %s17 = sadd.s32 1, %s13
    $region7: #{tpu_custom_call.1} parent=1 // loop_footer_branch
      %12 = sbr.rel target = $region3
    $region8: #{tpu_custom_call.1} parent=1 // loop_exit
      _
    %635 = vsyncpa [#allocation3], 1
    %s636 = scalar_lea.sflag [#allocation3], 1
    %637 = vsyncpa %s636, 1

</llo_original>
